<compile_context>
chip_gen: v7x
topology: tpu7x:2x2x1
jax: 0.10.0
libtpu: 0.0.40
codegen_flags: <defaults>
</compile_context>

<pallas_src>
import functools
import math

import jax
import jax.numpy as jnp
from jax import lax
from jax.experimental import pallas as pl
from jax.experimental.pallas import tpu as pltpu

# Below v7x's 64 MiB physical VMEM, above v5e's 16 MiB scoped default.
_VMEM_LIMIT_BYTES = 48 * 1024 * 1024


# ------------------------------- tiling helpers ------------------------------

def _pick_div(dim, prefs):
    """Largest preferred tile that evenly divides dim, else None."""
    for p in prefs:
        if dim % p == 0:
            return p
    return None


def _tile_and_pad(dim, prefs, align):
    """Return (tile, padded_dim).

    tile divides padded_dim, and the resulting block is (8,128)-legal: either
    `align`-aligned or equal to a small full dimension.  The caller zero-pads
    the array to padded_dim and slices the result back."""
    t = _pick_div(dim, prefs)
    if t is not None:
        return t, dim
    if dim < align:                       # tiny dim: full-extent block is legal
        return dim, dim
    pad = ((dim + align - 1) // align) * align
    t = _pick_div(pad, prefs)
    return (t if t is not None else align), pad


def _head_group_size(h, d_k):
    """Smallest divisor g of h with g*d_k a multiple of 128 (lane-dense tiles)."""
    for g in range(1, h + 1):
        if h % g == 0 and (g * d_k) % 128 == 0:
            return g
    return h


# ----------------------------- Pallas kernels -------------------------------

def _linear_kernel(x_ref, w_ref, b_ref, o_ref, acc_ref):
    # x_ref: (tm, tk), w_ref: (tk, tn), b_ref: (1, tn), o_ref: (tm, tn)
    @pl.when(pl.program_id(2) == 0)
    def _():
        acc_ref[...] = jnp.zeros_like(acc_ref)

    acc_ref[...] += jnp.dot(x_ref[...], w_ref[...],
                            preferred_element_type=jnp.float32)

    @pl.when(pl.program_id(2) == pl.num_programs(2) - 1)
    def _():
        o_ref[...] = (acc_ref[...]
                      + b_ref[...].astype(jnp.float32)).astype(o_ref.dtype)


def _flash_attn_kernel(keep_ref, q_ref, k_ref, v_ref, m_ref, o_ref,
                       acc_sc, m_sc, l_sc, *, g, d_k):
    # keep_ref : SMEM int32 (B*nq*nk,)   -- 1 if this (b, qi, ki) tile has any
    #                                       unmasked entry, else 0 (skip).
    # q_ref    : (tq, g*d_k) bf16 (scale already folded into W_q)
    # k_ref/v_ref: (tkv, g*d_k) bf16
    # m_ref    : (tq, tkv) int8, 0 = masked
    # o_ref    : (tq, g*d_k) lane-dense output slab for the whole head group.
    ki = pl.program_id(3)

    @pl.when(ki == 0)
    def _():
        m_sc[...] = jnp.full_like(m_sc, -jnp.inf)
        l_sc[...] = jnp.zeros_like(l_sc)
        acc_sc[...] = jnp.zeros_like(acc_sc)

    b = pl.program_id(0)
    qi = pl.program_id(2)
    nq = pl.num_programs(2)
    nk = pl.num_programs(3)
    keep = keep_ref[(b * nq + qi) * nk + ki] != 0

    @pl.when(keep)
    def _():
        q_all = q_ref[...]
        k_all = k_ref[...]
        v_all = v_ref[...]
        masked = m_ref[...].astype(jnp.int32) == 0        # (tq, tkv) bool

        for hh in range(g):
            cs = hh * d_k
            qh = q_all[:, cs:cs + d_k]                    # (tq, d_k)  bf16
            kh = k_all[:, cs:cs + d_k]                    # (tkv, d_k) bf16
            vh = v_all[:, cs:cs + d_k]                    # (tkv, d_k) bf16

            # scores on the MXU with f32 accumulation (bf16 operands).
            s = lax.dot_general(qh, kh, (((1,), (1,)), ((), ())),
                                preferred_element_type=jnp.float32)  # (tq, tkv)
            s = jnp.where(masked, jnp.float32(-1e9), s)

            m_prev = m_sc[:, hh:hh + 1]                                # (tq, 1)
            m_new = jnp.maximum(m_prev, jnp.max(s, axis=-1, keepdims=True))
            alpha = jnp.exp(m_prev - m_new)
            p = jnp.exp(s - m_new)                                     # f32

            l_sc[:, hh:hh + 1] = (alpha * l_sc[:, hh:hh + 1]
                                  + jnp.sum(p, -1, keepdims=True))
            acc_sc[:, cs:cs + d_k] = alpha * acc_sc[:, cs:cs + d_k] + jnp.dot(
                p.astype(v_all.dtype), vh, preferred_element_type=jnp.float32)
            m_sc[:, hh:hh + 1] = m_new

    @pl.when(ki == pl.num_programs(3) - 1)
    def _():
        for hh in range(g):
            cs = hh * d_k
            inv_l = pl.reciprocal(l_sc[:, hh:hh + 1], approx=True)
            o_ref[:, cs:cs + d_k] = (acc_sc[:, cs:cs + d_k] * inv_l).astype(o_ref.dtype)


# ----------------------------- Pallas wrappers ------------------------------

def pallas_linear(x2d, w_t, b, out_dtype=None):
    """y = x2d @ w_t + b.   x2d: (M, K), w_t: (K, N), b: (N,) f32."""
    M, K = x2d.shape
    N = w_t.shape[1]
    if out_dtype is None:
        out_dtype = x2d.dtype

    tm, Mp = _tile_and_pad(M, (512, 256, 128, 64, 32, 16, 8), 8)
    tn, Np = _tile_and_pad(N, (512, 256, 128), 128)
    tk, Kp = _tile_and_pad(K, (512, 256, 128), 128)

    if Mp != M or Kp != K:
        x2d = jnp.pad(x2d, ((0, Mp - M), (0, Kp - K)))
    if Kp != K or Np != N:
        w_t = jnp.pad(w_t, ((0, Kp - K), (0, Np - N)))
    if Np != N:
        b = jnp.pad(b, (0, Np - N))

    grid = (Mp // tm, Np // tn, Kp // tk)
    out = pl.pallas_call(
        _linear_kernel,
        out_shape=jax.ShapeDtypeStruct((Mp, Np), out_dtype),
        grid=grid,
        in_specs=[
            pl.BlockSpec((tm, tk), lambda i, j, kk: (i, kk)),
            pl.BlockSpec((tk, tn), lambda i, j, kk: (kk, j)),
            pl.BlockSpec((1, tn), lambda i, j, kk: (0, j)),
        ],
        out_specs=pl.BlockSpec((tm, tn), lambda i, j, kk: (i, j)),
        scratch_shapes=[pltpu.VMEM((tm, tn), jnp.float32)],
        compiler_params=pltpu.CompilerParams(
            dimension_semantics=("parallel", "parallel", "arbitrary"),
            vmem_limit_bytes=_VMEM_LIMIT_BYTES),
    )(x2d, w_t, b.reshape(1, -1))

    if Mp != M or Np != N:
        out = out[:M, :N]
    return out


def pallas_flash_attention(q_slab, k_slab, v_slab, mask, *, h, d_k, col_offsets,
                           out_dtype=None):
    """Flash attention over (B, S, *) activation slabs.

    Per-head columns are selected at col_offsets[i] + head*d_k directly via
    BlockSpec index_maps (so q/k/v may alias one fused (B, S, 3D) QKV slab or a
    (B, S, 2D) KV slab).  mask: (B, 1, Sq, Sk), 0 = masked (any int/bool dtype).
    Returns (B, Sq, h*d_k)."""
    B, Sq, _ = q_slab.shape
    Sk = k_slab.shape[1]
    D = h * d_k
    if out_dtype is None:
        out_dtype = q_slab.dtype
    if mask is None:
        mask = jnp.ones((B, 1, Sq, Sk), jnp.int8)

    g = _head_group_size(h, d_k)          # heads per grid step (lane-dense tiles)
    gd = g * d_k
    n_hg = h // g

    tq, Sq_pad = _tile_and_pad(Sq, (512, 256, 128, 64, 32, 16, 8), 8)
    tkv, Sk_pad = _tile_and_pad(Sk, (1024, 512, 256, 128), 128)

    def _pad_seq(a, s_new):
        s_old = a.shape[1]
        if s_new == s_old:
            return a
        return jnp.pad(a, ((0, 0), (0, s_new - s_old), (0, 0)))

    q_p = _pad_seq(q_slab, Sq_pad)
    k_p = q_p if (k_slab is q_slab and Sk_pad == Sq_pad) else _pad_seq(k_slab, Sk_pad)
    v_p = k_p if (v_slab is k_slab) else _pad_seq(v_slab, Sk_pad)

    # int8 mask (4x less DMA/VMEM than int32); padded keys masked out, padded
    # query rows left unmasked (they are sliced off and must stay finite).
    mask_i8 = (mask != 0).astype(jnp.int8)
    if mask_i8.shape[-1] != Sk_pad:
        mask_i8 = jnp.pad(mask_i8, ((0, 0), (0, 0), (0, 0),
                                    (0, Sk_pad - mask_i8.shape[-1])))
    if mask_i8.shape[-2] != Sq_pad:
        mask_i8 = jnp.pad(mask_i8, ((0, 0), (0, 0),
                                    (0, Sq_pad - mask_i8.shape[-2]), (0, 0)),
                          constant_values=1)

    nq, nk = Sq_pad // tq, Sk_pad // tkv

    # Per-(b, qi, ki) "any unmasked entry" table -> scalar-prefetched into SMEM
    # so fully-masked kv tiles (e.g. above the causal diagonal) are skipped.
    keep = (mask_i8[:, 0].reshape(B, nq, tq, nk, tkv).max(axis=(2, 4)) > 0)
    keep = keep.reshape(-1).astype(jnp.int32)            # (B*nq*nk,)

    qo, ko, vo = (c // gd for c in col_offsets)

    kern = functools.partial(_flash_attn_kernel, g=g, d_k=d_k)

    grid_spec = pltpu.PrefetchScalarGridSpec(
        num_scalar_prefetch=1,
        grid=(B, n_hg, nq, nk),
        in_specs=[
            pl.BlockSpec((None, tq, gd), lambda b, hg, qi, ki, kp: (b, qi, qo + hg)),
            pl.BlockSpec((None, tkv, gd), lambda b, hg, qi, ki, kp: (b, ki, ko + hg)),
            pl.BlockSpec((None, tkv, gd), lambda b, hg, qi, ki, kp: (b, ki, vo + hg)),
            pl.BlockSpec((None, None, tq, tkv),
                         lambda b, hg, qi, ki, kp: (b, 0, qi, ki)),
        ],
        out_specs=pl.BlockSpec((None, tq, gd), lambda b, hg, qi, ki, kp: (b, qi, hg)),
        scratch_shapes=[
            pltpu.VMEM((tq, gd), jnp.float32),   # acc (head-group output slab)
            pltpu.VMEM((tq, g), jnp.float32),    # running max per head
            pltpu.VMEM((tq, g), jnp.float32),    # running sum per head
        ],
    )

    out = pl.pallas_call(
        kern,
        out_shape=jax.ShapeDtypeStruct((B, Sq_pad, D), out_dtype),
        grid_spec=grid_spec,
        compiler_params=pltpu.CompilerParams(
            dimension_semantics=("parallel", "parallel", "parallel", "arbitrary"),
            vmem_limit_bytes=_VMEM_LIMIT_BYTES),
    )(keep, q_p, k_p, v_p, mask_i8)

    if Sq_pad != Sq:
        out = out[:, :Sq]
    return out


# --------------------------- Module forward (glue) ---------------------------

def prepare_params(wq, bq, wk, bk, wv, bv, wo, bo, h, dtype=jnp.bfloat16):
    """Build kernel params from PyTorch-style (out, in) weights.

    1/sqrt(d_k) is folded into the Q projection (weights + bias); weights are
    pre-cast to bf16 (MXU operands), biases stay f32 (added to f32 acc)."""
    d_model = wq.shape[0]
    d_k = d_model // h
    scale = jnp.float32(1.0 / math.sqrt(d_k))
    wq_s, bq_s = wq * scale, bq * scale
    return {
        "wq_t": wq_s.T.astype(dtype), "bq": bq_s.astype(jnp.float32),
        "wk_t": wk.T.astype(dtype),   "bk": bk.astype(jnp.float32),
        "wv_t": wv.T.astype(dtype),   "bv": bv.astype(jnp.float32),
        "wo_t": wo.T.astype(dtype),   "bo": bo.astype(jnp.float32),
        # fused QKV (self-attention) and KV (cross-attention, k is v) weights
        "wqkv_t": jnp.concatenate([wq_s.T, wk.T, wv.T], axis=1).astype(dtype),
        "bqkv": jnp.concatenate([bq_s, bk, bv]).astype(jnp.float32),
        "wkv_t": jnp.concatenate([wk.T, wv.T], axis=1).astype(dtype),
        "bkv": jnp.concatenate([bk, bv]).astype(jnp.float32),
    }


def multi_head_attention_forward(q, k, v, mask, params, h,
                                 compute_dtype=jnp.bfloat16):
    B, Sq, D = q.shape
    d_k = D // h
    fused_ok = (D % 128 == 0)             # lane-dense column slicing of fused slabs
    q_act = q.astype(compute_dtype)

    if (q is k) and (k is v) and fused_ok:
        # Self-attention fast path: one fused QKV matmul (x read from HBM once);
        # attention reads q/k/v column slices straight out of the fused slab.
        qkv = pallas_linear(q_act.reshape(B * Sq, D), params["wqkv_t"],
                            params["bqkv"], out_dtype=compute_dtype
                            ).reshape(B, Sq, 3 * D)
        x = pallas_flash_attention(qkv, qkv, qkv, mask, h=h, d_k=d_k,
                                   col_offsets=(0, D, 2 * D),
                                   out_dtype=compute_dtype)
    else:
        k_act = k.astype(compute_dtype)
        Sk = k.shape[1]
        Q = pallas_linear(q_act.reshape(B * Sq, D), params["wq_t"], params["bq"],
                          out_dtype=compute_dtype).reshape(B, Sq, D)
        if (k is v) and fused_ok:
            # Encoder-memory cross-attention: fuse wk/wv (k/v read once).
            kv = pallas_linear(k_act.reshape(B * Sk, D), params["wkv_t"],
                               params["bkv"], out_dtype=compute_dtype
                               ).reshape(B, Sk, 2 * D)
            x = pallas_flash_attention(Q, kv, kv, mask, h=h, d_k=d_k,
                                       col_offsets=(0, 0, D),
                                       out_dtype=compute_dtype)
        else:
            v_act = v.astype(compute_dtype)
            K_ = pallas_linear(k_act.reshape(B * Sk, D), params["wk_t"],
                               params["bk"], out_dtype=compute_dtype
                               ).reshape(B, Sk, D)
            V_ = pallas_linear(v_act.reshape(B * Sk, D), params["wv_t"],
                               params["bv"], out_dtype=compute_dtype
                               ).reshape(B, Sk, D)
            x = pallas_flash_attention(Q, K_, V_, mask, h=h, d_k=d_k,
                                       col_offsets=(0, 0, 0),
                                       out_dtype=compute_dtype)

    # Output projection (heads already merged in (B, S, D) layout — no transpose).
    out = pallas_linear(x.reshape(B * Sq, D), params["wo_t"], params["bo"],
                        out_dtype=jnp.float32)
    return out.reshape(B, Sq, D)


# ------------------------------ Pure-JAX reference ---------------------------

def reference_forward(q, k, v, mask, raw, h):
    B, Sq, D = q.shape
    d_k = D // h
    query = q @ raw["wq"].T + raw["bq"]
    key = k @ raw["wk"].T + raw["bk"]
    value = v @ raw["wv"].T + raw["bv"]
    qh = query.reshape(B, Sq, h, d_k).transpose(0, 2, 1, 3)
    kh = key.reshape(B, -1, h, d_k).transpose(0, 2, 1, 3)
    vh = value.reshape(B, -1, h, d_k).transpose(0, 2, 1, 3)
    scores = jnp.einsum("bhqd,bhkd->bhqk", qh, kh) / math.sqrt(d_k)
    scores = jnp.where(mask == 0, -1e9, scores)
    p = jax.nn.softmax(scores, axis=-1)
    x = jnp.einsum("bhqk,bhkd->bhqd", p, vh)
    x = x.transpose(0, 2, 1, 3).reshape(B, Sq, D)
    return x @ raw["wo"].T + raw["bo"]


# ------------------------------------ main -----------------------------------

if __name__ == "__main__":
    # small shapes consistent with the module (d_model % h == 0)
    B, S, D, H = 2, 8, 128, 4
    assert D % H == 0

    key0 = jax.random.PRNGKey(0)
    keys = jax.random.split(key0, 12)

    def init_linear(kw, kb, din, dout):
        bound = 1.0 / math.sqrt(din)
        w = jax.random.uniform(kw, (dout, din), jnp.float32, -bound, bound)
        b = jax.random.uniform(kb, (dout,), jnp.float32, -bound, bound)
        return w, b

    wq, bq = init_linear(keys[0], keys[1], D, D)
    wk, bk = init_linear(keys[2], keys[3], D, D)
    wv, bv = init_linear(keys[4], keys[5], D, D)
    wo, bo = init_linear(keys[6], keys[7], D, D)

    raw = {"wq": wq, "bq": bq, "wk": wk, "bk": bk,
           "wv": wv, "bv": bv, "wo": wo, "bo": bo}
    params = prepare_params(wq, bq, wk, bk, wv, bv, wo, bo, H)

    # bf16 MXU operands (f32 accumulation) -> compare vs f32 reference at 2e-2.
    TOL = dict(atol=2e-2, rtol=2e-2)

    # ---- self-attention (fused QKV path), causal mask ----
    x_in = jax.random.normal(keys[8], (B, S, D), jnp.float32)
    causal = jnp.broadcast_to(
        jnp.tril(jnp.ones((S, S), jnp.int32))[None, None], (B, 1, S, S))
    out_self = multi_head_attention_forward(x_in, x_in, x_in, causal, params, H)
    out_self = jax.block_until_ready(out_self)
    ref_self = reference_forward(x_in, x_in, x_in, causal, raw, H)
    assert out_self.shape == (B, S, D)
    assert jnp.allclose(out_self, ref_self, **TOL), "self-attn mismatch"

    # ---- cross-attention (separate-projection path), padding mask ----
    q_in = jax.random.normal(keys[9], (B, S, D), jnp.float32)
    k_in = jax.random.normal(keys[10], (B, S, D), jnp.float32)
    v_in = jax.random.normal(keys[11], (B, S, D), jnp.float32)
    pad = (jnp.arange(S) < (S - 2)).astype(jnp.int32)       # mask out last 2 keys
    pad_mask = jnp.broadcast_to(pad[None, None, None, :], (B, 1, S, S))
    out_x = multi_head_attention_forward(q_in, k_in, v_in, pad_mask, params, H)
    out_x = jax.block_until_ready(out_x)
    ref_x = reference_forward(q_in, k_in, v_in, pad_mask, raw, H)
    assert jnp.allclose(out_x, ref_x, **TOL), "cross-attn mismatch"

    # ---- cross-attention with shared k/v memory (fused KV path) ----
    out_kv = multi_head_attention_forward(q_in, k_in, k_in, pad_mask, params, H)
    out_kv = jax.block_until_ready(out_kv)
    ref_kv = reference_forward(q_in, k_in, k_in, pad_mask, raw, H)
    assert jnp.allclose(out_kv, ref_kv, **TOL), "fused-kv cross-attn mismatch"

    print("KERNEL_OK")
</pallas_src>

<mosaic_0001>
module attributes {stable_mosaic.version = 11 : i64} {
  func.func @_linear_kernel(%arg0: i32, %arg1: i32, %arg2: i32, %arg3: memref<16x128xbf16, #tpu.memory_space<vmem>>, %arg4: memref<128x128xbf16, #tpu.memory_space<vmem>>, %arg5: memref<1x128xf32, #tpu.memory_space<vmem>>, %arg6: memref<16x128xbf16, #tpu.memory_space<vmem>>, %arg7: memref<16x128xf32, #tpu.memory_space<vmem>>) attributes {dimension_semantics = [#tpu.dimension_semantics<parallel>, #tpu.dimension_semantics<parallel>, #tpu.dimension_semantics<arbitrary>], iteration_bounds = array<i64: 1, 3, 1>, scalar_prefetch = 0 : i64, scratch_operands = 1 : i64, tpu.core_type = #tpu.core_type<tc>, window_params = [{transform_indices = @transform_0, window_bounds = array<i64: 16, 128>}, {transform_indices = @transform_1, window_bounds = array<i64: 128, 128>}, {transform_indices = @transform_2, window_bounds = array<i64: 1, 128>}, {transform_indices = @transform_3, window_bounds = array<i64: 16, 128>}]} {
    %c0_i32 = arith.constant 0 : i32
    %0 = arith.cmpi eq, %arg2, %c0_i32 : i32
    %1 = arith.extui %0 : i1 to i32
    %c0_i32_0 = arith.constant 0 : i32
    %2 = arith.cmpi ne, %1, %c0_i32_0 : i32
    scf.if %2 {
      %cst_10 = arith.constant 0.000000e+00 : f32
      %12 = vector.broadcast %cst_10 : f32 to vector<16x128xf32>
      %c0_11 = arith.constant 0 : index
      %c0_12 = arith.constant 0 : index
      %13 = vector.load %arg7[%c0_11, %c0_12] : memref<16x128xf32, #tpu.memory_space<vmem>>, vector<16x128xf32>
      tpu.vector_store %arg7[%c0_11, %c0_12], %12 {strides = array<i32>} : memref<16x128xf32, #tpu.memory_space<vmem>>, vector<16x128xf32>,
    } else {
    }
    %c0 = arith.constant 0 : index
    %c0_1 = arith.constant 0 : index
    %3 = vector.load %arg7[%c0, %c0_1] : memref<16x128xf32, #tpu.memory_space<vmem>>, vector<16x128xf32>
    %c0_2 = arith.constant 0 : index
    %c0_3 = arith.constant 0 : index
    %4 = vector.load %arg3[%c0_2, %c0_3] : memref<16x128xbf16, #tpu.memory_space<vmem>>, vector<16x128xbf16>
    %c0_4 = arith.constant 0 : index
    %c0_5 = arith.constant 0 : index
    %5 = vector.load %arg4[%c0_4, %c0_5] : memref<128x128xbf16, #tpu.memory_space<vmem>>, vector<128x128xbf16>
    %cst = arith.constant dense<0.000000e+00> : vector<16x128xf32>
    %6 = tpu.matmul %4, %5, %cst {dimension_numbers = #tpu.dot_dimension_numbers<[1], [0], [0], [1], [0, 0, 1, 1], [], []>} : vector<16x128xbf16>, vector<128x128xbf16>, vector<16x128xf32> -> vector<16x128xf32>
    %7 = arith.addf %3, %6 : vector<16x128xf32>
    %c0_6 = arith.constant 0 : index
    %c0_7 = arith.constant 0 : index
    %8 = vector.load %arg7[%c0_6, %c0_7] : memref<16x128xf32, #tpu.memory_space<vmem>>, vector<16x128xf32>
    tpu.vector_store %arg7[%c0_6, %c0_7], %7 {strides = array<i32>} : memref<16x128xf32, #tpu.memory_space<vmem>>, vector<16x128xf32>,
    %c0_i32_8 = arith.constant 0 : i32
    %9 = arith.cmpi eq, %arg2, %c0_i32_8 : i32
    %10 = arith.extui %9 : i1 to i32
    %c0_i32_9 = arith.constant 0 : i32
    %11 = arith.cmpi ne, %10, %c0_i32_9 : i32
    scf.if %11 {
      %c0_10 = arith.constant 0 : index
      %c0_11 = arith.constant 0 : index
      %12 = vector.load %arg7[%c0_10, %c0_11] : memref<16x128xf32, #tpu.memory_space<vmem>>, vector<16x128xf32>
      %c0_12 = arith.constant 0 : index
      %c0_13 = arith.constant 0 : index
      %13 = vector.load %arg5[%c0_12, %c0_13] : memref<1x128xf32, #tpu.memory_space<vmem>>, vector<1x128xf32>
      %14 = vector.broadcast %13 : vector<1x128xf32> to vector<16x128xf32>
      %15 = arith.addf %12, %14 : vector<16x128xf32>
      %16 = arith.truncf %15 : vector<16x128xf32> to vector<16x128xbf16>
      %c0_14 = arith.constant 0 : index
      %c0_15 = arith.constant 0 : index
      %17 = vector.load %arg6[%c0_14, %c0_15] : memref<16x128xbf16, #tpu.memory_space<vmem>>, vector<16x128xbf16>
      tpu.vector_store %arg6[%c0_14, %c0_15], %16 {strides = array<i32>} : memref<16x128xbf16, #tpu.memory_space<vmem>>, vector<16x128xbf16>,
    } else {
    }
    return
  }
  func.func @transform_0(%arg0: i32, %arg1: i32, %arg2: i32) -> (i32, i32) {
    %c0_i32 = arith.constant 0 : i32
    return %arg0, %arg2 : i32, i32
  }
  func.func @transform_1(%arg0: i32, %arg1: i32, %arg2: i32) -> (i32, i32) {
    %c0_i32 = arith.constant 0 : i32
    return %arg2, %arg1 : i32, i32
  }
  func.func @transform_2(%arg0: i32, %arg1: i32, %arg2: i32) -> (i32, i32) {
    %c0_i32 = arith.constant 0 : i32
    %c0_i32_0 = arith.constant 0 : i32
    return %c0_i32, %arg1 : i32, i32
  }
  func.func @transform_3(%arg0: i32, %arg1: i32, %arg2: i32) -> (i32, i32) {
    %c0_i32 = arith.constant 0 : i32
    return %arg0, %arg1 : i32, i32
  }
}

</mosaic_0001>

<llo_original>
// kernel: tpu_custom_call.1
$region0: #{tpu_custom_call.1}
  #allocation0 [shape = 'u32[]', space=smem, size = 0x4, offset = 0x4, fixed_abs, tag = 'smem constant byte address 0x4 - core index']
  #allocation1 [shape = 'u32[144,128]{1,0:T(1,128)}', space=vmem, size = 0x12000, scoped, tag = 'internal scratch']
  #allocation2 [shape = 'f32[16,128]{1,0:T(8,128)}', space=vmem, size = 0x2000, scoped, tag = 'scratch operand']
  %s0 = inlined_call_operand.hbm [shape: bf16[16,128], index: 0, kind: input, shape index: {}]
  %s1 = inlined_call_operand.hbm [shape: bf16[128,384], index: 1, kind: input, shape index: {}]
  %s2 = inlined_call_operand.vmem [shape: f32[1,384], index: 2, kind: input, shape index: {}]
  %s3 = inlined_call_operand.hbm [shape: bf16[16,384], index: 3, kind: output, shape index: {}]
  %s4 = sld [smem:[#allocation0]]
  $region61: #{tpu_custom_call.1} parent=0
    _
  %s6 = ssub.s32 1, %s4
  %s7 = scalar_select 0, %s6, %s4
  $region1: #{tpu_custom_call.1} parent=0
    #allocation3 [shape = 'u8[4096]{0}', space=vmem, size = 0x1000, scoped, tag = 'input window, operand 0, single buffered']
    #allocation4 [shape = 's32[2]{0}', space=sflag, size = 0x8, scoped, tag = 'scoped memory for tpu_custom_call.1']
    #allocation5 [shape = 's32[2]{0}', space=sflag, size = 0x8, scoped, tag = 'scoped memory for tpu_custom_call.1']
    #allocation6 [shape = 'u8[65536]{0}', space=vmem, size = 0x10000, scoped, tag = 'input window, operand 1']
    #allocation7 [shape = 's32[2]{0}', space=sflag, size = 0x8, scoped, tag = 'scoped memory for tpu_custom_call.1']
    #allocation8 [shape = 'u8[8192]{0}', space=vmem, size = 0x2000, scoped, tag = 'output window, operand 0']
    %8 = vsyncpa [#allocation4], 0
    %9 = vsyncpa [#allocation7], 0
    %s10 = scalar_lea.sflag [#allocation7], 1
    %11 = vsyncpa %s10, 0
    %12 = vsyncpa [#allocation5], 0
    %s13 = scalar_lea.sflag [#allocation5], 1
    %14 = vsyncpa %s13, 0
    loop: start=0, step=1, limit=5
    $region2: #{tpu_custom_call.1} parent=1 // loop_pre_header
      _
    $region3: #{tpu_custom_call.1} parent=1 // loop_header
      %s16 = sphi 0, %s20
      %p17 = scmp.ge.s32.totalorder %s16, 5
      %s23 = sphi 0, %s42
      %s24 = sphi 0, %s38
      %s25 = sphi 0, %s34
      %s26 = sphi 0, %s23
      %s27 = sphi 0, %s24
      %s28 = sphi 0, %s25
      %s29 = sphi 0, %s26
      %s30 = sphi 0, %s27
      %s31 = sphi 0, %s28
      %s47 = sphi 0, %s49
      %s50 = sphi 0, %s47
      %s51 = sphi 0, %s50
      %s67 = sphi 0, %s51
      %s75 = sphi 0, %s77
      %s78 = sphi 0, %s75
      %s79 = sphi 0, %s78
      %s95 = sphi 0, %s79
      %s101 = sphi 0, %s103
      %s104 = sphi 0, %s101
      %s105 = sphi 0, %s104
      %s121 = sphi 0, %s105
      %s129 = sphi 0, %s131
      %s132 = sphi 0, %s129
      %s133 = sphi 0, %s132
      %s149 = sphi 0, %s133
    $region4: #{tpu_custom_call.1} parent=1 // loop_header_branch
      %19 = sbr.rel (%p17) target = $region8
    $region5: #{tpu_custom_call.1} parent=1 // loop_body
      %s21 = ssub.s32 %s16, 1
      %s22 = ssub.s32 %s16, 2
      %s32 = sadd.s32 1, %s25
      %p33 = scmp.ge.s32.totalorder %s32, 1
      %s34 = scalar_select %p33, 0, %s32
      %s35 = sadd.s32 1, %s24
      %s36 = scalar_select %p33, %s35, %s24
      %p37 = scmp.ge.s32.totalorder %s36, 3
      %s38 = scalar_select %p37, 0, %s36
      %s39 = sadd.s32 1, %s23
      %s40 = scalar_select %p37, %s39, %s23
      %p41 = scmp.ge.s32.totalorder %s40, 1
      %s42 = scalar_select %p41, 0, %s40
      %s43 = ssub.s32 %s23, %s42
      %s44 = ssub.s32 %s25, %s34
      %s45 = sor.u32 %s43, %s44
      %p46 = scmp.eq.s32.totalorder %s45, 0
      %s48 = sadd.s32 %s47, 1
      %s49 = scalar_select %p46, %s47, %s48
      %p52 = pneg %p46
      %p53 = scmp.eq.s32.totalorder %s16, 2
      %p54 = por %p52, %p53
      %p55 = scmp.ne.s32.totalorder %s47, %s50
      %p56 = scmp.eq.s32.totalorder %s16, 0
      %p57 = por %p55, %p56
      %p58 = scmp.ne.s32.totalorder %s47, %s50
      %p59 = scmp.eq.s32.totalorder %s21, 2
      %p60 = por %p58, %p59
      %p61 = scmp.ne.s32.totalorder %s50, %s51
      %p62 = scmp.eq.s32.totalorder %s21, 0
      %p63 = por %p61, %p62
      %p64 = scmp.ne.s32.totalorder %s50, %s51
      %p65 = scmp.eq.s32.totalorder %s22, 2
      %p66 = por %p64, %p65
      %p68 = scmp.ne.s32.totalorder %s51, %s67
      %p69 = scmp.eq.s32.totalorder %s22, 0
      %p70 = por %p68, %p69
      %s71 = ssub.s32 %s25, %s34
      %s72 = ssub.s32 %s24, %s38
      %s73 = sor.u32 %s71, %s72
      %p74 = scmp.eq.s32.totalorder %s73, 0
      %s76 = sadd.s32 %s75, 1
      %s77 = scalar_select %p74, %s75, %s76
      %p80 = pneg %p74
      %p81 = scmp.eq.s32.totalorder %s16, 2
      %p82 = por %p80, %p81
      %p83 = scmp.ne.s32.totalorder %s75, %s78
      %p84 = scmp.eq.s32.totalorder %s16, 0
      %p85 = por %p83, %p84
      %p86 = scmp.ne.s32.totalorder %s75, %s78
      %p87 = scmp.eq.s32.totalorder %s21, 2
      %p88 = por %p86, %p87
      %p89 = scmp.ne.s32.totalorder %s78, %s79
      %p90 = scmp.eq.s32.totalorder %s21, 0
      %p91 = por %p89, %p90
      %p92 = scmp.ne.s32.totalorder %s78, %s79
      %p93 = scmp.eq.s32.totalorder %s22, 2
      %p94 = por %p92, %p93
      %p96 = scmp.ne.s32.totalorder %s79, %s95
      %p97 = scmp.eq.s32.totalorder %s22, 0
      %p98 = por %p96, %p97
      %s99 = ssub.s32 %s24, %s38
      %p100 = scmp.eq.s32.totalorder %s99, 0
      %s102 = sadd.s32 %s101, 1
      %s103 = scalar_select %p100, %s101, %s102
      %p106 = pneg %p100
      %p107 = scmp.eq.s32.totalorder %s16, 2
      %p108 = por %p106, %p107
      %p109 = scmp.ne.s32.totalorder %s101, %s104
      %p110 = scmp.eq.s32.totalorder %s16, 0
      %p111 = por %p109, %p110
      %p112 = scmp.ne.s32.totalorder %s101, %s104
      %p113 = scmp.eq.s32.totalorder %s21, 2
      %p114 = por %p112, %p113
      %p115 = scmp.ne.s32.totalorder %s104, %s105
      %p116 = scmp.eq.s32.totalorder %s21, 0
      %p117 = por %p115, %p116
      %p118 = scmp.ne.s32.totalorder %s104, %s105
      %p119 = scmp.eq.s32.totalorder %s22, 2
      %p120 = por %p118, %p119
      %p122 = scmp.ne.s32.totalorder %s105, %s121
      %p123 = scmp.eq.s32.totalorder %s22, 0
      %p124 = por %p122, %p123
      %s125 = ssub.s32 %s23, %s42
      %s126 = ssub.s32 %s24, %s38
      %s127 = sor.u32 %s125, %s126
      %p128 = scmp.eq.s32.totalorder %s127, 0
      %s130 = sadd.s32 %s129, 1
      %s131 = scalar_select %p128, %s129, %s130
      %p134 = pneg %p128
      %p135 = scmp.eq.s32.totalorder %s16, 2
      %p136 = por %p134, %p135
      %p137 = scmp.ne.s32.totalorder %s129, %s132
      %p138 = scmp.eq.s32.totalorder %s16, 0
      %p139 = por %p137, %p138
      %p140 = scmp.ne.s32.totalorder %s129, %s132
      %p141 = scmp.eq.s32.totalorder %s21, 2
      %p142 = por %p140, %p141
      %p143 = scmp.ne.s32.totalorder %s132, %s133
      %p144 = scmp.eq.s32.totalorder %s21, 0
      %p145 = por %p143, %p144
      %p146 = scmp.ne.s32.totalorder %s132, %s133
      %p147 = scmp.eq.s32.totalorder %s22, 2
      %p148 = por %p146, %p147
      %p150 = scmp.ne.s32.totalorder %s133, %s149
      %p151 = scmp.eq.s32.totalorder %s22, 0
      %p152 = por %p150, %p151
      %p153 = scmp.le.s32.totalorder 1, %s16
      %p154 = scmp.lt.s32.totalorder %s16, 4
      %p155 = pnand %p153, %p154
      %p156 = pneg %p155
      // Predicated region
      $region9: #{tpu_custom_call.1} parent=5 // pred_check
        _
      $region10: #{tpu_custom_call.1} parent=5 // pred_check_branch
        %158 = sbr.rel (%p155) target = $region12
      $region11: #{tpu_custom_call.1} parent=5 // pred_region
        %s159 = ssub.s32 %s16, 1
        // Predicated region
        $region13: #{tpu_custom_call.1} parent=11 // pred_check
          %p160 = pneg %p63
        $region14: #{tpu_custom_call.1} parent=11 // pred_check_branch
          %162 = sbr.rel (%p160) target = $region16
        $region15: #{tpu_custom_call.1} parent=11 // pred_region
          %s163 = smul.u32 2, %s26
          %s165 = ssub.s32 128, 128
          %166 = vsyncadd [#allocation4], %s165
          %s167 = sadd.s32 %s28, %s163
          %s168 = smul.addr %s167, 64
          %s169 = scalar_lea.hbm %s0, %s168
          %s170 = sshll.u32 [#allocation3], 4
          %s171 = int_to_ptr.vmem [resolvable:$true] %s170
          %176 = dma.hbm_to_vmem [thread:$0]  %s169, 128, %s171, [#allocation4], 64, 64, 4
        $region16: #{tpu_custom_call.1} parent=11 // pred_fallthru
          _
      $region12: #{tpu_custom_call.1} parent=5 // pred_fallthru
        _
      %p177 = scmp.lt.s32.totalorder %s16, 3
      // Predicated region
      $region17: #{tpu_custom_call.1} parent=5 // pred_check
        %p178 = pneg %p177
      $region18: #{tpu_custom_call.1} parent=5 // pred_check_branch
        %180 = sbr.rel (%p178) target = $region20
      $region19: #{tpu_custom_call.1} parent=5 // pred_region
        // Predicated region
        $region21: #{tpu_custom_call.1} parent=19 // pred_check
          %p181 = pneg %p85
        $region22: #{tpu_custom_call.1} parent=19 // pred_check_branch
          %183 = sbr.rel (%p181) target = $region24
        $region23: #{tpu_custom_call.1} parent=19 // pred_region
          %s184 = sand.u32 %s75, 1
          %s185 = scalar_lea.sflag [#allocation7], %s184
          %s186 = sand.u32 %s75, 1
          %s187 = smul.addr %s186, 64
          %s188 = scalar_lea.vmem [#allocation6], %s187
          %s189 = smul.u32 16, %s25
          %s191 = ssub.s32 1024, 1024
          %192 = vsyncadd %s185, %s191
          %s193 = smul.addr %s189, 3
          %s194 = sadd.s32 %s24, %s193
          %s195 = smul.addr %s194, 64
          %s196 = scalar_lea.hbm %s1, %s195
          %s197 = sshll.u32 %s188, 4
          %s198 = int_to_ptr.vmem [resolvable:$true] %s197
          %203 = dma.hbm_to_vmem [thread:$0]  %s196, 1024, %s198, %s185, 192, 64, 4
        $region24: #{tpu_custom_call.1} parent=19 // pred_fallthru
          _
        // Predicated region
        $region25: #{tpu_custom_call.1} parent=19 // pred_check
          %p204 = pneg %p111
        $region26: #{tpu_custom_call.1} parent=19 // pred_check_branch
          %206 = sbr.rel (%p204) target = $region28
        $region27: #{tpu_custom_call.1} parent=19 // pred_region
          %p207 = scmp.lt.s32.totalorder %s24, 2
          %s208 = scalar_select %p207, %s24, 2
          %s209 = scalar_lea.vmem %s2, %s208
        $region28: #{tpu_custom_call.1} parent=19 // pred_fallthru
          _
      $region20: #{tpu_custom_call.1} parent=5 // pred_fallthru
        _
      %p210 = scmp.le.s32.totalorder 1, %s16
      %p211 = scmp.lt.s32.totalorder %s16, 4
      %p212 = pnand %p210, %p211
      %p213 = pneg %p212
      // Predicated region
      $region29: #{tpu_custom_call.1} parent=5 // pred_check
        _
      $region30: #{tpu_custom_call.1} parent=5 // pred_check_branch
        %215 = sbr.rel (%p212) target = $region32
      $region31: #{tpu_custom_call.1} parent=5 // pred_region
        %s216 = ssub.s32 %s16, 1
        // Predicated region
        $region33: #{tpu_custom_call.1} parent=31 // pred_check
          %p217 = pneg %p63
        $region34: #{tpu_custom_call.1} parent=31 // pred_check_branch
          %219 = sbr.rel (%p217) target = $region36
        $region35: #{tpu_custom_call.1} parent=31 // pred_region
          %220 = dma.done [#allocation4], 128
        $region36: #{tpu_custom_call.1} parent=31 // pred_fallthru
          _
        %s221 = sand.u32 %s78, 1
        %s222 = scalar_lea.sflag [#allocation7], %s221
        %s223 = sand.u32 %s78, 1
        %s224 = smul.addr %s223, 64
        %s225 = scalar_lea.vmem [#allocation6], %s224
        // Predicated region
        $region37: #{tpu_custom_call.1} parent=31 // pred_check
          %p226 = pneg %p91
        $region38: #{tpu_custom_call.1} parent=31 // pred_check_branch
          %228 = sbr.rel (%p226) target = $region40
        $region39: #{tpu_custom_call.1} parent=31 // pred_region
          %229 = dma.done %s222, 1024
        $region40: #{tpu_custom_call.1} parent=31 // pred_fallthru
          _
        %p230 = pneg %p63
        %p231 = pneg %p60
        %s232 = sand.u32 %s78, 1
        %s233 = scalar_lea.sflag [#allocation7], %s232
        %s234 = sand.u32 %s78, 1
        %s235 = smul.addr %s234, 64
        %s236 = scalar_lea.vmem [#allocation6], %s235
        %p237 = pneg %p91
        %p238 = pneg %p88
        %p239 = scmp.lt.s32.totalorder %s27, 2
        %s240 = scalar_select %p239, %s27, 2
        %s241 = scalar_lea.vmem %s2, %s240
        %p242 = pneg %p117
        %p243 = pneg %p114
        %p244 = pneg %p145
        %p245 = pneg %p142
        %s246 = sand.u32 %s132, 1
        %s247 = scalar_lea.sflag [#allocation5], %s246
        %s248 = sand.u32 %s132, 1
        %s249 = smul.addr %s248, 8
        %s250 = scalar_lea.vmem [#allocation8], %s249
        %s251 = smul.u32 2, %s26
        %s252 = smul.u32 16, %s28
        %p253 = scmp.lt.s32.totalorder %s27, 2
        %s254 = scalar_select %p253, %s27, 2
        %s255 = scalar_lea.vmem %s2, %s254
        %s256 = smul.u32 2, %s26
        %p258 = scmp.eq.s32.totalorder %s28, 0
        // Predicated region
        $region41: #{tpu_custom_call.1} parent=31 // pred_check
          %p259 = pneg %p258
        $region42: #{tpu_custom_call.1} parent=31 // pred_check_branch
          %261 = sbr.rel (%p259) target = $region44
        $region43: #{tpu_custom_call.1} parent=31 // pred_region
          %262 = vst [vmem:[#allocation2] sm:$0xff] 0.0
          %263 = vst [vmem:[#allocation2 + $0x8] sm:$0xff] 0.0
        $region44: #{tpu_custom_call.1} parent=31 // pred_fallthru
          _
        %v264 = vld [vmem:[#allocation2] sm:$0xff]
        %v265 = vld [vmem:[#allocation2 + $0x8] sm:$0xff]
        %v266 = vld [vmem:[#allocation3] sm:$0xf]
        %v267 = vld [vmem:[#allocation3 + $0x4] sm:$0xf]
        %v268 = vld [vmem:[%s225] sm:$0xf]
        %v269 = vld [vmem:[%s225 + $0x4] sm:$0xf]
        %v270 = vld [vmem:[%s225 + $0x8] sm:$0xf]
        %v271 = vld [vmem:[%s225 + $0xc] sm:$0xf]
        %v272 = vld [vmem:[%s225 + $0x10] sm:$0xf]
        %v273 = vld [vmem:[%s225 + $0x14] sm:$0xf]
        %v274 = vld [vmem:[%s225 + $0x18] sm:$0xf]
        %v275 = vld [vmem:[%s225 + $0x1c] sm:$0xf]
        %v276 = vld [vmem:[%s225 + $0x20] sm:$0xf]
        %v277 = vld [vmem:[%s225 + $0x24] sm:$0xf]
        %v278 = vld [vmem:[%s225 + $0x28] sm:$0xf]
        %v279 = vld [vmem:[%s225 + $0x2c] sm:$0xf]
        %v280 = vld [vmem:[%s225 + $0x30] sm:$0xf]
        %v281 = vld [vmem:[%s225 + $0x34] sm:$0xf]
        %v282 = vld [vmem:[%s225 + $0x38] sm:$0xf]
        %v283 = vld [vmem:[%s225 + $0x3c] sm:$0xf]
        %v286 = vunpack.c.l.b16 %v266
        %v287 = vunpack.c.l.b16 %v267
        %v288 = vpack.c.b16 %v287, %v286
        %v306 = vunpack.c.l.b16 %v268
        %v307 = vunpack.c.l.b16 %v269
        %v308 = vunpack.c.l.b16 %v270
        %v309 = vunpack.c.l.b16 %v271
        %v310 = vunpack.c.l.b16 %v272
        %v311 = vunpack.c.l.b16 %v273
        %v312 = vunpack.c.l.b16 %v274
        %v313 = vunpack.c.l.b16 %v275
        %v314 = vunpack.c.l.b16 %v276
        %v315 = vunpack.c.l.b16 %v277
        %v316 = vunpack.c.l.b16 %v278
        %v317 = vunpack.c.l.b16 %v279
        %v318 = vunpack.c.l.b16 %v280
        %v319 = vunpack.c.l.b16 %v281
        %v320 = vunpack.c.l.b16 %v282
        %v321 = vunpack.c.l.b16 %v283
        %v322 = vpack.c.b16 %v307, %v306
        %v323 = vpack.c.b16 %v309, %v308
        %v324 = vpack.c.b16 %v311, %v310
        %v325 = vpack.c.b16 %v313, %v312
        %v326 = vpack.c.b16 %v315, %v314
        %v327 = vpack.c.b16 %v317, %v316
        %v328 = vpack.c.b16 %v319, %v318
        %v329 = vpack.c.b16 %v321, %v320
        %338 = vmatprep.subr.bf16.mxu0 0
        %339 = vmatpush1.bf16.msra.mxu0 %v322
        %340 = vmatprep.subr.bf16.mxu0 0
        %341 = vmatpush1.bf16.msra.mxu0 %v323
        %342 = vmatprep.subr.bf16.mxu0 0
        %343 = vmatpush1.bf16.msra.mxu0 %v324
        %344 = vmatprep.subr.bf16.mxu0 0
        %345 = vmatpush1.bf16.msra.mxu0 %v325
        %346 = vmatprep.subr.bf16.mxu0 0
        %347 = vmatpush1.bf16.msra.mxu0 %v326
        %348 = vmatprep.subr.bf16.mxu0 0
        %349 = vmatpush1.bf16.msra.mxu0 %v327
        %350 = vmatprep.subr.bf16.mxu0 0
        %351 = vmatpush1.bf16.msra.mxu0 %v328
        %352 = vmatprep.subr.bf16.mxu0 0
        %353 = vmatpush1.bf16.msra.mxu0 %v329
        %354 = vmatprep.subr.bf16.mxu0 0
        %355 = vmatpush1.bf16.msra.mxu0 0
        %356 = vmatprep.subr.bf16.mxu0 0
        %357 = vmatpush1.bf16.msra.mxu0 0
        %358 = vmatprep.subr.bf16.mxu0 0
        %359 = vmatpush1.bf16.msra.mxu0 0
        %360 = vmatprep.subr.bf16.mxu0 0
        %361 = vmatpush1.bf16.msra.mxu0 0
        %362 = vmatprep.subr.bf16.mxu0 0
        %363 = vmatpush1.bf16.msra.mxu0 0
        %364 = vmatprep.subr.bf16.mxu0 0
        %365 = vmatpush1.bf16.msra.mxu0 0
        %366 = vmatprep.subr.bf16.mxu0 0
        %367 = vmatpush1.bf16.msra.mxu0 0
        %368 = vmatprep.subr.bf16.mxu0 0
        %369 = vmatpush1.bf16.msra.mxu0 0
        %370 = vmatprep.mubr.bf16.mxu0 0
        %371 = vmatmul.mubr.bf16.gmra.mrb[0].mxu0 %v288
        %v372 = vpop.f32.mrb[0].mxu0
        %v373 = vadd.f32 0.0, %v372
        %v374 = vpop.f32.mrb[0].mxu0
        %v375 = vpop.f32.mrb[0].mxu0
        %v376 = vadd.f32 0.0, %v375
        %v377 = vpop.f32.mrb[0].mxu0
        %378 = vdwg.mxu0
        %v379 = vadd.f32 %v264, %v373
        %v380 = vadd.f32 %v265, %v376
        %381 = vst [vmem:[#allocation2] sm:$0xff] %v379
        %382 = vst [vmem:[#allocation2 + $0x8] sm:$0xff] %v380
        // Predicated region
        $region45: #{tpu_custom_call.1} parent=31 // pred_check
          %p383 = pneg %p258
        $region46: #{tpu_custom_call.1} parent=31 // pred_check_branch
          %385 = sbr.rel (%p383) target = $region48
        $region47: #{tpu_custom_call.1} parent=31 // pred_region
          %v386 = vld [vmem:[#allocation2] sm:$0xff]
          %v387 = vld [vmem:[#allocation2 + $0x8] sm:$0xff]
          %v388 = vld [vmem:[%s255] sm:$0x1]
          %v390 = vlaneseq
          %v391 = vshrl.u32 %v390, 7
          %v392 = vsub.s32 0, %v391
          %v393 = vrot.slane %v388, %v392
          %v395 = vadd.f32 %v386, %v393
          %v396 = vadd.f32 %v387, %v393
          %v397 = vpack.c.bf16 %v396, %v395
          %v399 = vunpack.c.l.b16 %v397
          %v400 = vunpack.c.h.b16 %v397
          %v401 = vpack.c.b16 %v399, %v399
          %v402 = vpack.c.b16 %v400, %v400
          %405 = vst [vmem:[%s250] sm:$0xf] %v401
          %406 = vst [vmem:[%s250 + $0x4] sm:$0xf] %v402
        $region48: #{tpu_custom_call.1} parent=31 // pred_fallthru
          _
        %s407 = sand.u32 %s132, 1
        %s408 = scalar_lea.sflag [#allocation5], %s407
        %s409 = sand.u32 %s132, 1
        %s410 = smul.addr %s409, 8
        %s411 = scalar_lea.vmem [#allocation8], %s410
        // Predicated region
        $region49: #{tpu_custom_call.1} parent=31 // pred_check
          %p412 = pneg %p142
        $region50: #{tpu_custom_call.1} parent=31 // pred_check_branch
          %414 = sbr.rel (%p412) target = $region52
        $region51: #{tpu_custom_call.1} parent=31 // pred_region
          %s415 = smul.u32 2, %s26
          %s417 = ssub.s32 128, 128
          %418 = vsyncadd %s408, %s417
          %s419 = smul.addr %s415, 3
          %s420 = sadd.s32 %s27, %s419
          %s421 = smul.addr %s420, 64
          %s422 = scalar_lea.hbm %s3, %s421
          %s423 = sshll.u32 %s411, 4
          %s424 = int_to_ptr.vmem [resolvable:$true] %s423
          %429 = dma.vmem_to_hbm [thread:$0]  %s424, 128, %s422, %s408, 64, 192, 4
        $region52: #{tpu_custom_call.1} parent=31 // pred_fallthru
          _
      $region32: #{tpu_custom_call.1} parent=5 // pred_fallthru
        _
      %p430 = scmp.le.s32.totalorder 2, %s16
      // Predicated region
      $region53: #{tpu_custom_call.1} parent=5 // pred_check
        %p431 = pneg %p430
      $region54: #{tpu_custom_call.1} parent=5 // pred_check_branch
        %433 = sbr.rel (%p431) target = $region56
      $region55: #{tpu_custom_call.1} parent=5 // pred_region
        %s434 = ssub.s32 %s16, 2
        // Predicated region
        $region57: #{tpu_custom_call.1} parent=55 // pred_check
          %p435 = pneg %p148
        $region58: #{tpu_custom_call.1} parent=55 // pred_check_branch
          %437 = sbr.rel (%p435) target = $region60
        $region59: #{tpu_custom_call.1} parent=55 // pred_region
          %s438 = sand.u32 %s133, 1
          %s439 = scalar_lea.sflag [#allocation5], %s438
          %s440 = sand.u32 %s133, 1
          %s441 = smul.addr %s440, 8
          %s442 = scalar_lea.vmem [#allocation8], %s441
          %443 = dma.done %s439, 128
        $region60: #{tpu_custom_call.1} parent=55 // pred_fallthru
          _
      $region56: #{tpu_custom_call.1} parent=5 // pred_fallthru
        _
    $region6: #{tpu_custom_call.1} parent=1 // loop_footer
      %s20 = sadd.s32 1, %s16
    $region7: #{tpu_custom_call.1} parent=1 // loop_footer_branch
      %15 = sbr.rel target = $region3
    $region8: #{tpu_custom_call.1} parent=1 // loop_exit
      _
    %444 = vsyncpa [#allocation4], 1
    %s445 = scalar_lea.sflag [#allocation4], 1
    %446 = vsyncpa %s445, 1
    %447 = vsyncpa [#allocation7], 1
    %s448 = scalar_lea.sflag [#allocation7], 1
    %449 = vsyncpa %s448, 1
    %450 = vsyncpa [#allocation5], 1
    %s451 = scalar_lea.sflag [#allocation5], 1
    %452 = vsyncpa %s451, 1

</llo_original>
